<compile_context>
chip_gen: v6e
topology: v6e:2x2x1
jax: 0.10.0
libtpu: 0.0.40
codegen_flags: <defaults>
</compile_context>

<pallas_src>
import functools

import jax
import jax.numpy as jnp
from jax import lax
from jax.experimental import pallas as pl
from jax.experimental.pallas import tpu as pltpu


def _conv_dropout_kernel(x_ref, w_ref, b_ref, m_ref, o_ref, *, KH, KW, Wp, block_n):
    # x_ref: (BN, C_in, L)        bf16  flattened zero-padded images + flat halo
    # w_ref: (C_out, KH*KW*C_in)  bf16  taps folded into the contraction dim
    # b_ref: (C_out, 1)           f32
    # m_ref: (BN, C_out, 1)       f32   per-sample channel mask * 1/(1-p)
    # o_ref: (BN, C_out, Hp*Wp)   out dtype, lane axis = padded spatial (>=128 wide)
    _, c_out, hw = o_ref.shape
    wv = w_ref[...]                                  # folded weights, loaded once per step
    bv = b_ref[...]
    for b in range(block_n):                         # small static unroll; samples independent
        xv = x_ref[b]                                # (C_in, L) bf16
        # Build the (KH*KW*C_in, Hp*Wp) operand from 9 static lane slices of the
        # halo'd image, then contract everything in ONE deep-K MXU matmul.
        # (Slice starts are not 128-aligned -> Mosaic emits lane relayouts here;
        #  that is the remaining vector-op cost in the tiny-C_in regime.)
        taps = []
        for kh in range(KH):
            for kw in range(KW):
                start = kh * Wp + kw                 # static lane offset into the halo'd image
                taps.append(xv[:, start:start + hw]) # (C_in, hw)
        op = jnp.concatenate(taps, axis=0)           # (KH*KW*C_in, hw) bf16
        acc = jnp.dot(wv, op, preferred_element_type=jnp.float32)   # (C_out, hw) f32, one MXU pass
        out = (acc + bv) * m_ref[b]                  # bias + dropout2d channel scale (f32 epilogue)
        o_ref[b] = out.astype(o_ref.dtype)


def conv2d_dropout_forward(x, weight, bias, drop_mask, *, padding=1, block_n=None):
    """x: [N, C_in, H, W] (NCHW). weight: [C_out, C_in, KH, KW]. bias: [C_out].
    drop_mask: [N, C_out] float mask already including the 1/(1-p) scale."""
    N, C_in, H, W = x.shape
    C_out, C_in_w, KH, KW = weight.shape
    assert C_in_w == C_in
    assert KH == 2 * padding + 1 and KW == 2 * padding + 1, "same-padding conv"

    Hp, Wp = H + 2 * padding, W + 2 * padding
    hw = Hp * Wp
    halo = padding * (Wp + 1)                        # flat halo so tap slices never wrap
    L = hw + 2 * halo
    K = KH * KW * C_in

    # --- layout plumbing: pad only W spatially, then ONE flat pad supplies the
    # top/bottom zero rows AND the halo (same contents as pad(H,W)+pad(flat)). ---
    x_bf = x.astype(jnp.bfloat16)
    xw = jnp.pad(x_bf, ((0, 0), (0, 0), (0, 0), (padding, padding)))   # (N, C_in, H, Wp)
    xf = xw.reshape(N, C_in, H * Wp)
    flat_pad = padding * Wp + halo
    xe = jnp.pad(xf, ((0, 0), (0, 0), (flat_pad, flat_pad)))           # (N, C_in, L) bf16

    # folded weights: contraction index = kh*(KW*C_in) + kw*C_in + c_in
    w_fold = (weight.astype(jnp.bfloat16)
              .transpose(0, 2, 3, 1)                 # (C_out, KH, KW, C_in)
              .reshape(C_out, K))
    b2d = bias.astype(jnp.float32).reshape(C_out, 1)
    m3d = drop_mask.astype(jnp.float32).reshape(N, C_out, 1)

    # --- fatten grid steps: BN samples per step (divisor of N) under a VMEM budget ---
    per_sample = C_in * L * 2 + C_out * hw * 4 + K * hw * 2 + C_out * hw * 4
    if block_n is None:
        budget = 8 * 2**20
        block_n = 1
        for d in range(1, min(N, 8) + 1):
            if N % d == 0 and d * per_sample <= budget:
                block_n = d
    assert N % block_n == 0
    grid = (N // block_n,)

    # scoped VMEM sized to the real block footprint (double-buffered I/O + in-kernel temps)
    footprint = (2 * block_n * C_in * L * 2                      # x blocks (x2 buffers)
                 + 2 * block_n * C_out * hw * 4                  # out blocks (x2 buffers)
                 + 2 * (C_out * K * 2 + C_out * 4 + block_n * C_out * 4)   # weights/bias/mask
                 + block_n * (K * hw * 2 + C_out * hw * 4))      # stacked operand + acc temps
    vmem_limit = int(min(96 * 2**20, max(32 * 2**20, 2 * footprint)))

    kernel = functools.partial(_conv_dropout_kernel, KH=KH, KW=KW, Wp=Wp,
                               block_n=block_n)

    cost = pl.CostEstimate(
        flops=2 * N * hw * K * C_out,
        transcendentals=0,
        bytes_accessed=(xe.size * 2 + w_fold.size * 2 + b2d.size * 4
                        + m3d.size * 4 + N * C_out * hw * 4),
    )

    out = pl.pallas_call(
        kernel,
        out_shape=jax.ShapeDtypeStruct((N, C_out, hw), x.dtype),
        grid=grid,
        in_specs=[
            pl.BlockSpec((block_n, C_in, L), lambda i: (i, 0, 0)),      # BN images per step
            pl.BlockSpec((C_out, K),         lambda i: (0, 0)),         # folded weights resident
            pl.BlockSpec((C_out, 1),         lambda i: (0, 0)),         # bias resident
            pl.BlockSpec((block_n, C_out, 1), lambda i: (i, 0, 0)),     # per-sample channel masks
        ],
        out_specs=pl.BlockSpec((block_n, C_out, hw), lambda i: (i, 0, 0)),  # lane axis = Hp*Wp
        compiler_params=pltpu.CompilerParams(
            dimension_semantics=("parallel",),
            vmem_limit_bytes=vmem_limit),
        cost_estimate=cost,
    )(xe, w_fold, b2d, m3d)

    # [N, C_out, Hp*Wp] is already channel-major -> just crop the padded border.
    # TODO(synk): for W >= 128 the border crop could be done in-kernel with pl.ds
    # stores (or the padded tensor returned for the consumer to fuse) to avoid
    # this extra HBM pass over the output; output could also be bf16 downstream.
    out = out.reshape(N, C_out, Hp, Wp)
    return out[:, :, padding:padding + H, padding:padding + W]


if __name__ == "__main__":
    key = jax.random.PRNGKey(0)
    k_x, k_w, k_b, k_drop = jax.random.split(key, 4)

    # small, deterministic shapes consistent with the module
    N, C_in, H, W = 2, 4, 16, 16
    C_out, KH, KW = 8, 3, 3
    p = 0.3

    x = jax.random.normal(k_x, (N, C_in, H, W), dtype=jnp.float32)
    weight = 0.1 * jax.random.normal(k_w, (C_out, C_in, KH, KW), dtype=jnp.float32)
    bias = 0.1 * jax.random.normal(k_b, (C_out,), dtype=jnp.float32)

    # mc_dropout2d: always training=True -> stochastic channel mask, scaled by 1/(1-p).
    # TODO(synk): channel-dropout RNG is generated in JAX glue (jax.random); could be
    # moved in-kernel with pltpu.prng_seed / pltpu.prng_random_bits.
    keep = jax.random.bernoulli(k_drop, 1.0 - p, (N, C_out))
    drop_mask = keep.astype(jnp.float32) / (1.0 - p)

    y = conv2d_dropout_forward(x, weight, bias, drop_mask, padding=1)
    y = jax.block_until_ready(y)

    # pure-JAX reference with the same bf16 operand quantization (f32 accumulation)
    x_q = x.astype(jnp.bfloat16).astype(jnp.float32)
    w_q = weight.astype(jnp.bfloat16).astype(jnp.float32)
    y_ref = lax.conv_general_dilated(
        x_q, w_q, window_strides=(1, 1), padding=((1, 1), (1, 1)),
        dimension_numbers=("NCHW", "OIHW", "NCHW"))
    y_ref = y_ref + bias[None, :, None, None]
    y_ref = y_ref * drop_mask[:, :, None, None]

    assert y.shape == (N, C_out, H, W)
    assert jnp.allclose(y, y_ref, atol=1e-3, rtol=1e-3), float(jnp.max(jnp.abs(y - y_ref)))

    print("KERNEL_OK")
</pallas_src>

<mosaic_0001>
module attributes {stable_mosaic.version = 11 : i64} {
  func.func @_conv_dropout_kernel(%arg0: i32, %arg1: memref<2x4x362xbf16, #tpu.memory_space<vmem>>, %arg2: memref<8x36xbf16, #tpu.memory_space<vmem>>, %arg3: memref<8x1xf32, #tpu.memory_space<vmem>>, %arg4: memref<2x8x1xf32, #tpu.memory_space<vmem>>, %arg5: memref<2x8x324xf32, #tpu.memory_space<vmem>>) attributes {dimension_semantics = [#tpu.dimension_semantics<parallel>], iteration_bounds = array<i64: 1>, scalar_prefetch = 0 : i64, scratch_operands = 0 : i64, tpu.core_type = #tpu.core_type<tc>, window_params = [{transform_indices = @transform_0, window_bounds = array<i64: 2, 4, 362>}, {pipeline_mode = #tpu.pipeline_mode<synchronous>, transform_indices = @transform_1, window_bounds = array<i64: 8, 36>}, {pipeline_mode = #tpu.pipeline_mode<synchronous>, transform_indices = @transform_2, window_bounds = array<i64: 8, 1>}, {transform_indices = @transform_3, window_bounds = array<i64: 2, 8, 1>}, {transform_indices = @transform_4, window_bounds = array<i64: 2, 8, 324>}]} {
    %c0 = arith.constant 0 : index
    %c0_0 = arith.constant 0 : index
    %0 = vector.load %arg2[%c0, %c0_0] : memref<8x36xbf16, #tpu.memory_space<vmem>>, vector<8x36xbf16>
    %c0_1 = arith.constant 0 : index
    %c0_2 = arith.constant 0 : index
    %1 = vector.load %arg3[%c0_1, %c0_2] : memref<8x1xf32, #tpu.memory_space<vmem>>, vector<8x1xf32>
    %c0_3 = arith.constant 0 : index
    %c0_4 = arith.constant 0 : index
    %c0_5 = arith.constant 0 : index
    %2 = vector.load %arg1[%c0_3, %c0_4, %c0_5] : memref<2x4x362xbf16, #tpu.memory_space<vmem>>, vector<1x4x362xbf16>
    %3 = vector.shape_cast %2 : vector<1x4x362xbf16> to vector<4x362xbf16>
    %4 = vector.extract_strided_slice %3 {offsets = [0, 0], sizes = [4, 324], strides = [1, 1]} : vector<4x362xbf16> to vector<4x324xbf16>
    %5 = vector.extract_strided_slice %3 {offsets = [0, 1], sizes = [4, 324], strides = [1, 1]} : vector<4x362xbf16> to vector<4x324xbf16>
    %6 = vector.extract_strided_slice %3 {offsets = [0, 2], sizes = [4, 324], strides = [1, 1]} : vector<4x362xbf16> to vector<4x324xbf16>
    %7 = vector.extract_strided_slice %3 {offsets = [0, 18], sizes = [4, 324], strides = [1, 1]} : vector<4x362xbf16> to vector<4x324xbf16>
    %8 = vector.extract_strided_slice %3 {offsets = [0, 19], sizes = [4, 324], strides = [1, 1]} : vector<4x362xbf16> to vector<4x324xbf16>
    %9 = vector.extract_strided_slice %3 {offsets = [0, 20], sizes = [4, 324], strides = [1, 1]} : vector<4x362xbf16> to vector<4x324xbf16>
    %10 = vector.extract_strided_slice %3 {offsets = [0, 36], sizes = [4, 324], strides = [1, 1]} : vector<4x362xbf16> to vector<4x324xbf16>
    %11 = vector.extract_strided_slice %3 {offsets = [0, 37], sizes = [4, 324], strides = [1, 1]} : vector<4x362xbf16> to vector<4x324xbf16>
    %12 = vector.extract_strided_slice %3 {offsets = [0, 38], sizes = [4, 324], strides = [1, 1]} : vector<4x362xbf16> to vector<4x324xbf16>
    %13 = tpu.concatenate %4, %5, %6, %7, %8, %9, %10, %11, %12 in 0 : vector<4x324xbf16>, vector<4x324xbf16>, vector<4x324xbf16>, vector<4x324xbf16>, vector<4x324xbf16>, vector<4x324xbf16>, vector<4x324xbf16>, vector<4x324xbf16>, vector<4x324xbf16> -> vector<36x324xbf16>
    %cst = arith.constant dense<0.000000e+00> : vector<8x324xf32>
    %14 = tpu.matmul %0, %13, %cst {dimension_numbers = #tpu.dot_dimension_numbers<[1], [0], [0], [1], [0, 0, 1, 1], [], []>} : vector<8x36xbf16>, vector<36x324xbf16>, vector<8x324xf32> -> vector<8x324xf32>
    %15 = vector.broadcast %1 : vector<8x1xf32> to vector<8x324xf32>
    %16 = arith.addf %14, %15 : vector<8x324xf32>
    %c0_6 = arith.constant 0 : index
    %c0_7 = arith.constant 0 : index
    %c0_8 = arith.constant 0 : index
    %17 = vector.load %arg4[%c0_6, %c0_7, %c0_8] : memref<2x8x1xf32, #tpu.memory_space<vmem>>, vector<1x8x1xf32>
    %18 = vector.shape_cast %17 : vector<1x8x1xf32> to vector<8x1xf32>
    %19 = vector.broadcast %18 : vector<8x1xf32> to vector<8x324xf32>
    %20 = arith.mulf %16, %19 : vector<8x324xf32>
    %c0_9 = arith.constant 0 : index
    %c0_10 = arith.constant 0 : index
    %c0_11 = arith.constant 0 : index
    %21 = vector.load %arg5[%c0_9, %c0_10, %c0_11] : memref<2x8x324xf32, #tpu.memory_space<vmem>>, vector<1x8x324xf32>
    %22 = vector.shape_cast %21 : vector<1x8x324xf32> to vector<8x324xf32>
    %23 = vector.shape_cast %20 : vector<8x324xf32> to vector<1x8x324xf32>
    tpu.vector_store %arg5[%c0_9, %c0_10, %c0_11], %23 {strides = array<i32>} : memref<2x8x324xf32, #tpu.memory_space<vmem>>, vector<1x8x324xf32>,
    %c1 = arith.constant 1 : index
    %c0_12 = arith.constant 0 : index
    %c0_13 = arith.constant 0 : index
    %24 = vector.load %arg1[%c1, %c0_12, %c0_13] : memref<2x4x362xbf16, #tpu.memory_space<vmem>>, vector<1x4x362xbf16>
    %25 = vector.shape_cast %24 : vector<1x4x362xbf16> to vector<4x362xbf16>
    %26 = vector.extract_strided_slice %25 {offsets = [0, 0], sizes = [4, 324], strides = [1, 1]} : vector<4x362xbf16> to vector<4x324xbf16>
    %27 = vector.extract_strided_slice %25 {offsets = [0, 1], sizes = [4, 324], strides = [1, 1]} : vector<4x362xbf16> to vector<4x324xbf16>
    %28 = vector.extract_strided_slice %25 {offsets = [0, 2], sizes = [4, 324], strides = [1, 1]} : vector<4x362xbf16> to vector<4x324xbf16>
    %29 = vector.extract_strided_slice %25 {offsets = [0, 18], sizes = [4, 324], strides = [1, 1]} : vector<4x362xbf16> to vector<4x324xbf16>
    %30 = vector.extract_strided_slice %25 {offsets = [0, 19], sizes = [4, 324], strides = [1, 1]} : vector<4x362xbf16> to vector<4x324xbf16>
    %31 = vector.extract_strided_slice %25 {offsets = [0, 20], sizes = [4, 324], strides = [1, 1]} : vector<4x362xbf16> to vector<4x324xbf16>
    %32 = vector.extract_strided_slice %25 {offsets = [0, 36], sizes = [4, 324], strides = [1, 1]} : vector<4x362xbf16> to vector<4x324xbf16>
    %33 = vector.extract_strided_slice %25 {offsets = [0, 37], sizes = [4, 324], strides = [1, 1]} : vector<4x362xbf16> to vector<4x324xbf16>
    %34 = vector.extract_strided_slice %25 {offsets = [0, 38], sizes = [4, 324], strides = [1, 1]} : vector<4x362xbf16> to vector<4x324xbf16>
    %35 = tpu.concatenate %26, %27, %28, %29, %30, %31, %32, %33, %34 in 0 : vector<4x324xbf16>, vector<4x324xbf16>, vector<4x324xbf16>, vector<4x324xbf16>, vector<4x324xbf16>, vector<4x324xbf16>, vector<4x324xbf16>, vector<4x324xbf16>, vector<4x324xbf16> -> vector<36x324xbf16>
    %cst_14 = arith.constant dense<0.000000e+00> : vector<8x324xf32>
    %36 = tpu.matmul %0, %35, %cst_14 {dimension_numbers = #tpu.dot_dimension_numbers<[1], [0], [0], [1], [0, 0, 1, 1], [], []>} : vector<8x36xbf16>, vector<36x324xbf16>, vector<8x324xf32> -> vector<8x324xf32>
    %37 = vector.broadcast %1 : vector<8x1xf32> to vector<8x324xf32>
    %38 = arith.addf %36, %37 : vector<8x324xf32>
    %c1_15 = arith.constant 1 : index
    %c0_16 = arith.constant 0 : index
    %c0_17 = arith.constant 0 : index
    %39 = vector.load %arg4[%c1_15, %c0_16, %c0_17] : memref<2x8x1xf32, #tpu.memory_space<vmem>>, vector<1x8x1xf32>
    %40 = vector.shape_cast %39 : vector<1x8x1xf32> to vector<8x1xf32>
    %41 = vector.broadcast %40 : vector<8x1xf32> to vector<8x324xf32>
    %42 = arith.mulf %38, %41 : vector<8x324xf32>
    %c1_18 = arith.constant 1 : index
    %c0_19 = arith.constant 0 : index
    %c0_20 = arith.constant 0 : index
    %43 = vector.load %arg5[%c1_18, %c0_19, %c0_20] : memref<2x8x324xf32, #tpu.memory_space<vmem>>, vector<1x8x324xf32>
    %44 = vector.shape_cast %43 : vector<1x8x324xf32> to vector<8x324xf32>
    %45 = vector.shape_cast %42 : vector<8x324xf32> to vector<1x8x324xf32>
    tpu.vector_store %arg5[%c1_18, %c0_19, %c0_20], %45 {strides = array<i32>} : memref<2x8x324xf32, #tpu.memory_space<vmem>>, vector<1x8x324xf32>,
    return
  }
  func.func @transform_0(%arg0: i32) -> (i32, i32, i32) {
    %c0_i32 = arith.constant 0 : i32
    %c0_i32_0 = arith.constant 0 : i32
    %c0_i32_1 = arith.constant 0 : i32
    return %arg0, %c0_i32, %c0_i32_0 : i32, i32, i32
  }
  func.func @transform_1(%arg0: i32) -> (i32, i32) {
    %c0_i32 = arith.constant 0 : i32
    %c0_i32_0 = arith.constant 0 : i32
    %c0_i32_1 = arith.constant 0 : i32
    return %c0_i32, %c0_i32_0 : i32, i32
  }
  func.func @transform_2(%arg0: i32) -> (i32, i32) {
    %c0_i32 = arith.constant 0 : i32
    %c0_i32_0 = arith.constant 0 : i32
    %c0_i32_1 = arith.constant 0 : i32
    return %c0_i32, %c0_i32_0 : i32, i32
  }
  func.func @transform_3(%arg0: i32) -> (i32, i32, i32) {
    %c0_i32 = arith.constant 0 : i32
    %c0_i32_0 = arith.constant 0 : i32
    %c0_i32_1 = arith.constant 0 : i32
    return %arg0, %c0_i32, %c0_i32_0 : i32, i32, i32
  }
  func.func @transform_4(%arg0: i32) -> (i32, i32, i32) {
    %c0_i32 = arith.constant 0 : i32
    %c0_i32_0 = arith.constant 0 : i32
    %c0_i32_1 = arith.constant 0 : i32
    return %arg0, %c0_i32, %c0_i32_0 : i32, i32, i32
  }
}

</mosaic_0001>

<llo_original>
// kernel: tpu_custom_call.1
$region0: #{tpu_custom_call.1}
  #allocation0 [shape = 'u32[]', space=smem, size = 0x4, offset = 0x4, fixed_abs, tag = 'smem constant byte address 0x4 - core index']
  #allocation1 [shape = 'u32[144,128]{1,0:T(1,128)}', space=vmem, size = 0x12000, scoped, tag = 'internal scratch']
  %s0 = inlined_call_operand.vmem [shape: bf16[2,4,362], index: 0, kind: input, shape index: {}]
  %s1 = inlined_call_operand.vmem [shape: bf16[8,36], index: 1, kind: input, shape index: {}]
  %s2 = inlined_call_operand.vmem [shape: f32[8,1], index: 2, kind: input, shape index: {}]
  %s3 = inlined_call_operand.vmem [shape: f32[2,8,1], index: 3, kind: input, shape index: {}]
  %s4 = inlined_call_operand.hbm [shape: f32[2,8,324], index: 4, kind: output, shape index: {}]
  %s5 = sld [smem:[#allocation0]]
  $region26: #{tpu_custom_call.1} parent=0
    _
  %s7 = ssub.s32 1, %s5
  %s8 = scalar_select 0, %s7, %s5
  $region1: #{tpu_custom_call.1} parent=0
    #allocation2 [shape = 'u8[24576]{0}', space=vmem, size = 0x6000, scoped, tag = 'output window, operand 0, single buffered']
    #allocation3 [shape = 's32[1]{0}', space=sflag, size = 0x4, scoped, tag = 'scoped memory for tpu_custom_call.1']
    %9 = vsyncpa [#allocation3], 0
    // Predicated region
    $region2: #{tpu_custom_call.1} parent=1 // pred_check
      _
    $region3: #{tpu_custom_call.1} parent=1 // pred_check_branch
      %11 = sbr.rel (0) target = $region5
    $region4: #{tpu_custom_call.1} parent=1 // pred_region
      _
    $region5: #{tpu_custom_call.1} parent=1 // pred_fallthru
      _
    // Predicated region
    $region6: #{tpu_custom_call.1} parent=1 // pred_check
      _
    $region7: #{tpu_custom_call.1} parent=1 // pred_check_branch
      %13 = sbr.rel (0) target = $region9
    $region8: #{tpu_custom_call.1} parent=1 // pred_region
      _
    $region9: #{tpu_custom_call.1} parent=1 // pred_fallthru
      _
    // Predicated region
    $region10: #{tpu_custom_call.1} parent=1 // pred_check
      _
    $region11: #{tpu_custom_call.1} parent=1 // pred_check_branch
      %15 = sbr.rel (0) target = $region13
    $region12: #{tpu_custom_call.1} parent=1 // pred_region
      _
    $region13: #{tpu_custom_call.1} parent=1 // pred_fallthru
      _
    // Predicated region
    $region14: #{tpu_custom_call.1} parent=1 // pred_check
      _
    $region15: #{tpu_custom_call.1} parent=1 // pred_check_branch
      %17 = sbr.rel (0) target = $region17
    $region16: #{tpu_custom_call.1} parent=1 // pred_region
      _
    $region17: #{tpu_custom_call.1} parent=1 // pred_fallthru
      _
    %v19 = vld [vmem:[%s1] sm:$0xf]
    %v20 = vld [vmem:[%s2] sm:$0xff]
    %v21 = vld [vmem:[%s0] sm:$0x3f]
    %v23 = vcombine.high %v21, %v21
    %v25 = vunpack.c.l.s4 1983009808
    %v26 = vunpack.c.0.s8 %v25
    %v27 = vlaneseq
    %v28 = vshrl.u32 %v27, 7
    %v29 = vsub.s32 %v26, %v28
    %v30 = vrot.slane %v21, %v29
    %v32 = vunpack.c.l.s4 1983009808
    %v33 = vunpack.c.0.s8 %v32
    %v34 = vlaneseq
    %v35 = vshrl.u32 %v34, 7
    %v36 = vsub.s32 %v33, %v35
    %v37 = vrot.slane %v23, %v36
    %v38 = vcombine.high %v30, %v30
    %v39 = vcombine.low %v21, %v21
    %v41 = vunpack.c.l.s4 1983009808
    %v42 = vunpack.c.0.s8 %v41
    %v43 = vlaneseq
    %v44 = vshrl.u32 %v43, 7
    %v45 = vsub.s32 %v42, %v44
    %v46 = vrot.slane %v39, %v45
    %v47 = vcombine.high %v46, %v46
    %48 = vrot.lane.b32.xlu0 %v46, 127
    %v49 = vpop.permute.xlu0 %48
    %50 = vrot.lane.b32.xlu0 %v47, 127
    %v51 = vpop.permute.xlu0 %50
    %52 = vrot.lane.b32.xlu0 %v30, 127
    %v53 = vpop.permute.xlu0 %52
    %vm54 = vcmask 1039360
    %v55 = vsel %vm54, %v49, %v51
    %v56 = vsel %vm54, %v51, %v53
    %v57 = vcombine.low %v30, %v30
    %v58 = vcombine.low %v37, %v37
    %59 = vrot.lane.b32.xlu0 %v57, 126
    %v60 = vpop.permute.xlu0 %59
    %61 = vrot.lane.b32.xlu0 %v30, 126
    %v62 = vpop.permute.xlu0 %61
    %63 = vrot.lane.b32.xlu0 %v58, 126
    %v64 = vpop.permute.xlu0 %63
    %vm65 = vcmask 1031168
    %v66 = vsel %vm65, %v60, %v62
    %v67 = vsel %vm65, %v62, %v64
    %v68 = vcombine.low %v46, %v46
    %69 = vrot.lane.b32.xlu0 %v68, 110
    %v70 = vpop.permute.xlu0 %69
    %71 = vrot.lane.b32.xlu0 %v46, 110
    %v72 = vpop.permute.xlu0 %71
    %73 = vrot.lane.b32.xlu0 %v57, 110
    %v74 = vpop.permute.xlu0 %73
    %vm75 = vcmask 900096
    %v76 = vsel %vm75, %v70, %v72
    %v77 = vsel %vm75, %v72, %v74
    %78 = vrot.lane.b32.xlu0 %v30, 109
    %v79 = vpop.permute.xlu0 %78
    %80 = vrot.lane.b32.xlu0 %v38, 109
    %v81 = vpop.permute.xlu0 %80
    %82 = vrot.lane.b32.xlu0 %v37, 109
    %v83 = vpop.permute.xlu0 %82
    %vm84 = vcmask 891904
    %v85 = vsel %vm84, %v79, %v81
    %v86 = vsel %vm84, %v81, %v83
    %87 = vrot.lane.b32.xlu0 %v46, 108
    %v88 = vpop.permute.xlu0 %87
    %89 = vrot.lane.b32.xlu0 %v47, 108
    %v90 = vpop.permute.xlu0 %89
    %91 = vrot.lane.b32.xlu0 %v30, 108
    %v92 = vpop.permute.xlu0 %91
    %vm93 = vcmask 883712
    %v94 = vsel %vm93, %v88, %v90
    %v95 = vsel %vm93, %v90, %v92
    %96 = vrot.lane.b32.xlu0 %v57, 92
    %v97 = vpop.permute.xlu0 %96
    %98 = vrot.lane.b32.xlu0 %v30, 92
    %v99 = vpop.permute.xlu0 %98
    %100 = vrot.lane.b32.xlu0 %v58, 92
    %v101 = vpop.permute.xlu0 %100
    %vm102 = vcmask 752640
    %v103 = vsel %vm102, %v97, %v99
    %v104 = vsel %vm102, %v99, %v101
    %105 = vrot.lane.b32.xlu0 %v68, 91
    %v106 = vpop.permute.xlu0 %105
    %107 = vrot.lane.b32.xlu0 %v46, 91
    %v108 = vpop.permute.xlu0 %107
    %109 = vrot.lane.b32.xlu0 %v57, 91
    %v110 = vpop.permute.xlu0 %109
    %vm111 = vcmask 744448
    %v112 = vsel %vm111, %v106, %v108
    %v113 = vsel %vm111, %v108, %v110
    %114 = vrot.lane.b32.xlu0 %v30, 90
    %v115 = vpop.permute.xlu0 %114
    %116 = vrot.lane.b32.xlu0 %v38, 90
    %v117 = vpop.permute.xlu0 %116
    %118 = vrot.lane.b32.xlu0 %v37, 90
    %v119 = vpop.permute.xlu0 %118
    %vm120 = vcmask 736256
    %v121 = vsel %vm120, %v115, %v117
    %v122 = vsel %vm120, %v117, %v119
    %vm123 = vcmask 1041408
    %v126 = vsel %vm123, %v30, %v55
    %v129 = vsel %vm123, %v38, %v56
    %v132 = vsel %vm123, %v37, %v53
    %vm133 = vcmask 1043456
    %v135 = vsel %vm133, %v126, %v66
    %v137 = vsel %vm133, %v129, %v67
    %v139 = vsel %vm133, %v132, %v64
    %vm140 = vcmask 1045504
    %v142 = vsel %vm140, %v135, %v76
    %v145 = vsel %vm140, %v137, %v77
    %v148 = vsel %vm140, %v139, %v74
    %v152 = vsel %vm123, %v85, %v94
    %v155 = vsel %vm123, %v86, %v95
    %v158 = vsel %vm123, %v83, %v92
    %v160 = vsel %vm133, %v152, %v103
    %v162 = vsel %vm133, %v155, %v104
    %v164 = vsel %vm133, %v158, %v101
    %v166 = vsel %vm140, %v160, %v112
    %v169 = vsel %vm140, %v162, %v113
    %v172 = vsel %vm140, %v164, %v110
    %175 = vset.pattern.permute.xlu0 0
    %176 = vperm.xlu0 %175, %v20
    %v177 = vpop.permute.xlu0 %176
    %vm179 = vcmask 293888
    %v181 = vsel %vm179, %v19, 0
    %v184 = vsel %vm123, %v121, 0
    %v187 = vsel %vm123, %v122, 0
    %v190 = vsel %vm123, %v119, 0
    %192 = vmatprep.subr.bf16.mxu0 0
    %193 = vmatpush1.bf16.msra.mxu0 0
    %194 = vmatprep.subr.bf16.mxu0 0
    %195 = vmatpush1.bf16.msra.mxu0 0
    %196 = vmatprep.subr.bf16.mxu0 0
    %197 = vmatpush1.bf16.msra.mxu0 0
    %198 = vmatprep.subr.bf16.mxu0 0
    %199 = vmatpush1.bf16.msra.mxu0 0
    %200 = vmatprep.subr.bf16.mxu0 0
    %201 = vmatpush1.bf16.msra.mxu0 0
    %202 = vmatprep.subr.bf16.mxu0 %v187
    %203 = vmatpush1.bf16.msra.mxu0 %v184
    %204 = vmatprep.subr.bf16.mxu0 %v169
    %205 = vmatpush1.bf16.msra.mxu0 %v166
    %206 = vmatprep.subr.bf16.mxu0 %v145
    %207 = vmatpush1.bf16.msra.mxu0 %v142
    %208 = vmatprep.subr.bf16.mxu0 0
    %209 = vmatpush2.bf16.msra.mxu0 0
    %210 = vmatprep.subr.bf16.mxu0 0
    %211 = vmatpush2.bf16.msra.mxu0 0
    %212 = vmatprep.subr.bf16.mxu0 0
    %213 = vmatpush2.bf16.msra.mxu0 0
    %214 = vmatprep.subr.bf16.mxu0 0
    %215 = vmatpush2.bf16.msra.mxu0 0
    %216 = vmatprep.subr.bf16.mxu0 0
    %217 = vmatpush2.bf16.msra.mxu0 0
    %218 = vmatprep.subr.bf16.mxu0 0
    %219 = vmatpush2.bf16.msra.mxu0 0
    %220 = vmatprep.subr.bf16.mxu0 0
    %221 = vmatpush2.bf16.msra.mxu0 0
    %222 = vmatprep.subr.bf16.mxu0 0
    %223 = vmatpush2.bf16.msra.mxu0 0
    %224 = vmatprep.mubr.bf16.mxu0 0
    %225 = vmatmul.mubr.bf16.gmra.mxu0 %v181
    %v226 = vpop.f32.mrf.mxu0
    %v227 = vadd.f32 %v177, %v226
    %v228 = vpop.f32.mrf.mxu0
    %v229 = vadd.f32 %v177, %v228
    %v230 = vpop.f32.mrf.mxu0
    %v231 = vpop.f32.mrf.mxu0
    %232 = vdwg.mxu0
    %233 = vmatprep.subr.bf16.mxu0 0
    %234 = vmatpush1.bf16.msra.mxu0 0
    %235 = vmatprep.subr.bf16.mxu0 0
    %236 = vmatpush1.bf16.msra.mxu0 0
    %237 = vmatprep.subr.bf16.mxu0 0
    %238 = vmatpush1.bf16.msra.mxu0 0
    %239 = vmatprep.subr.bf16.mxu0 0
    %240 = vmatpush1.bf16.msra.mxu0 0
    %241 = vmatprep.subr.bf16.mxu0 0
    %242 = vmatpush1.bf16.msra.mxu0 0
    %243 = vmatprep.subr.bf16.mxu0 0
    %244 = vmatpush1.bf16.msra.mxu0 %v190
    %245 = vmatprep.subr.bf16.mxu0 0
    %246 = vmatpush1.bf16.msra.mxu0 %v172
    %247 = vmatprep.subr.bf16.mxu0 0
    %248 = vmatpush1.bf16.msra.mxu0 %v148
    %249 = vmatprep.subr.bf16.mxu0 0
    %250 = vmatpush2.bf16.msra.mxu0 0
    %251 = vmatprep.subr.bf16.mxu0 0
    %252 = vmatpush2.bf16.msra.mxu0 0
    %253 = vmatprep.subr.bf16.mxu0 0
    %254 = vmatpush2.bf16.msra.mxu0 0
    %255 = vmatprep.subr.bf16.mxu0 0
    %256 = vmatpush2.bf16.msra.mxu0 0
    %257 = vmatprep.subr.bf16.mxu0 0
    %258 = vmatpush2.bf16.msra.mxu0 0
    %259 = vmatprep.subr.bf16.mxu0 0
    %260 = vmatpush2.bf16.msra.mxu0 0
    %261 = vmatprep.subr.bf16.mxu0 0
    %262 = vmatpush2.bf16.msra.mxu0 0
    %263 = vmatprep.subr.bf16.mxu0 0
    %264 = vmatpush2.bf16.msra.mxu0 0
    %265 = vmatprep.mubr.bf16.mxu0 0
    %266 = vmatmul.mubr.bf16.gmra.mxu0 %v181
    %v267 = vpop.f32.mrf.mxu0
    %v268 = vadd.f32 %v177, %v267
    %v269 = vpop.f32.mrf.mxu0
    %v270 = vpop.f32.mrf.mxu0
    %v271 = vpop.f32.mrf.mxu0
    %272 = vdwg.mxu0
    %v273 = vld [vmem:[%s3] sm:$0xff]
    %275 = vset.pattern.permute.xlu0 0
    %276 = vperm.xlu0 %275, %v273
    %v277 = vpop.permute.xlu0 %276
    %v279 = vmul.f32 %v227, %v277
    %v280 = vmul.f32 %v229, %v277
    %v281 = vmul.f32 %v268, %v277
    %282 = vst [vmem:[#allocation2] sm:$0xff] %v279
    %283 = vst [vmem:[#allocation2 + $0x8] sm:$0xff] %v280
    %vm284 = vcmask 556032
    %285 = vst.msk [vmem:[#allocation2 + $0x10] sm:$0xff] %vm284, %v281
    %s286 = scalar_lea.vmem %s0, 6
    %v287 = vld [vmem:[%s286] sm:$0x3f]
    %v289 = vcombine.high %v287, %v287
    %v291 = vunpack.c.l.s4 1983009808
    %v292 = vunpack.c.0.s8 %v291
    %v293 = vlaneseq
    %v294 = vshrl.u32 %v293, 7
    %v295 = vsub.s32 %v292, %v294
    %v296 = vrot.slane %v287, %v295
    %v298 = vunpack.c.l.s4 1983009808
    %v299 = vunpack.c.0.s8 %v298
    %v300 = vlaneseq
    %v301 = vshrl.u32 %v300, 7
    %v302 = vsub.s32 %v299, %v301
    %v303 = vrot.slane %v289, %v302
    %v304 = vcombine.high %v296, %v296
    %v305 = vcombine.low %v287, %v287
    %v307 = vunpack.c.l.s4 1983009808
    %v308 = vunpack.c.0.s8 %v307
    %v309 = vlaneseq
    %v310 = vshrl.u32 %v309, 7
    %v311 = vsub.s32 %v308, %v310
    %v312 = vrot.slane %v305, %v311
    %v313 = vcombine.high %v312, %v312
    %314 = vrot.lane.b32.xlu0 %v312, 127
    %v315 = vpop.permute.xlu0 %314
    %316 = vrot.lane.b32.xlu0 %v313, 127
    %v317 = vpop.permute.xlu0 %316
    %318 = vrot.lane.b32.xlu0 %v296, 127
    %v319 = vpop.permute.xlu0 %318
    %v320 = vsel %vm54, %v315, %v317
    %v321 = vsel %vm54, %v317, %v319
    %v322 = vcombine.low %v296, %v296
    %v323 = vcombine.low %v303, %v303
    %324 = vrot.lane.b32.xlu0 %v322, 126
    %v325 = vpop.permute.xlu0 %324
    %326 = vrot.lane.b32.xlu0 %v296, 126
    %v327 = vpop.permute.xlu0 %326
    %328 = vrot.lane.b32.xlu0 %v323, 126
    %v329 = vpop.permute.xlu0 %328
    %v330 = vsel %vm65, %v325, %v327
    %v331 = vsel %vm65, %v327, %v329
    %v332 = vcombine.low %v312, %v312
    %333 = vrot.lane.b32.xlu0 %v332, 110
    %v334 = vpop.permute.xlu0 %333
    %335 = vrot.lane.b32.xlu0 %v312, 110
    %v336 = vpop.permute.xlu0 %335
    %337 = vrot.lane.b32.xlu0 %v322, 110
    %v338 = vpop.permute.xlu0 %337
    %v339 = vsel %vm75, %v334, %v336
    %v340 = vsel %vm75, %v336, %v338
    %341 = vrot.lane.b32.xlu0 %v296, 109
    %v342 = vpop.permute.xlu0 %341
    %343 = vrot.lane.b32.xlu0 %v304, 109
    %v344 = vpop.permute.xlu0 %343
    %345 = vrot.lane.b32.xlu0 %v303, 109
    %v346 = vpop.permute.xlu0 %345
    %v347 = vsel %vm84, %v342, %v344
    %v348 = vsel %vm84, %v344, %v346
    %349 = vrot.lane.b32.xlu0 %v312, 108
    %v350 = vpop.permute.xlu0 %349
    %351 = vrot.lane.b32.xlu0 %v313, 108
    %v352 = vpop.permute.xlu0 %351
    %353 = vrot.lane.b32.xlu0 %v296, 108
    %v354 = vpop.permute.xlu0 %353
    %v355 = vsel %vm93, %v350, %v352
    %v356 = vsel %vm93, %v352, %v354
    %357 = vrot.lane.b32.xlu0 %v322, 92
    %v358 = vpop.permute.xlu0 %357
    %359 = vrot.lane.b32.xlu0 %v296, 92
    %v360 = vpop.permute.xlu0 %359
    %361 = vrot.lane.b32.xlu0 %v323, 92
    %v362 = vpop.permute.xlu0 %361
    %v363 = vsel %vm102, %v358, %v360
    %v364 = vsel %vm102, %v360, %v362
    %365 = vrot.lane.b32.xlu0 %v332, 91
    %v366 = vpop.permute.xlu0 %365
    %367 = vrot.lane.b32.xlu0 %v312, 91
    %v368 = vpop.permute.xlu0 %367
    %369 = vrot.lane.b32.xlu0 %v322, 91
    %v370 = vpop.permute.xlu0 %369
    %v371 = vsel %vm111, %v366, %v368
    %v372 = vsel %vm111, %v368, %v370
    %373 = vrot.lane.b32.xlu0 %v296, 90
    %v374 = vpop.permute.xlu0 %373
    %375 = vrot.lane.b32.xlu0 %v304, 90
    %v376 = vpop.permute.xlu0 %375
    %377 = vrot.lane.b32.xlu0 %v303, 90
    %v378 = vpop.permute.xlu0 %377
    %v379 = vsel %vm120, %v374, %v376
    %v380 = vsel %vm120, %v376, %v378
    %v383 = vsel %vm123, %v296, %v320
    %v386 = vsel %vm123, %v304, %v321
    %v389 = vsel %vm123, %v303, %v319
    %v391 = vsel %vm133, %v383, %v330
    %v393 = vsel %vm133, %v386, %v331
    %v395 = vsel %vm133, %v389, %v329
    %v397 = vsel %vm140, %v391, %v339
    %v400 = vsel %vm140, %v393, %v340
    %v403 = vsel %vm140, %v395, %v338
    %v407 = vsel %vm123, %v347, %v355
    %v410 = vsel %vm123, %v348, %v356
    %v413 = vsel %vm123, %v346, %v354
    %v415 = vsel %vm133, %v407, %v363
    %v417 = vsel %vm133, %v410, %v364
    %v419 = vsel %vm133, %v413, %v362
    %v421 = vsel %vm140, %v415, %v371
    %v424 = vsel %vm140, %v417, %v372
    %v427 = vsel %vm140, %v419, %v370
    %v430 = vsel %vm123, %v379, 0
    %v433 = vsel %vm123, %v380, 0
    %v436 = vsel %vm123, %v378, 0
    %438 = vmatprep.subr.bf16.mxu0 0
    %439 = vmatpush1.bf16.msra.mxu0 0
    %440 = vmatprep.subr.bf16.mxu0 0
    %441 = vmatpush1.bf16.msra.mxu0 0
    %442 = vmatprep.subr.bf16.mxu0 0
    %443 = vmatpush1.bf16.msra.mxu0 0
    %444 = vmatprep.subr.bf16.mxu0 0
    %445 = vmatpush1.bf16.msra.mxu0 0
    %446 = vmatprep.subr.bf16.mxu0 0
    %447 = vmatpush1.bf16.msra.mxu0 0
    %448 = vmatprep.subr.bf16.mxu0 %v433
    %449 = vmatpush1.bf16.msra.mxu0 %v430
    %450 = vmatprep.subr.bf16.mxu0 %v424
    %451 = vmatpush1.bf16.msra.mxu0 %v421
    %452 = vmatprep.subr.bf16.mxu0 %v400
    %453 = vmatpush1.bf16.msra.mxu0 %v397
    %454 = vmatprep.subr.bf16.mxu0 0
    %455 = vmatpush2.bf16.msra.mxu0 0
    %456 = vmatprep.subr.bf16.mxu0 0
    %457 = vmatpush2.bf16.msra.mxu0 0
    %458 = vmatprep.subr.bf16.mxu0 0
    %459 = vmatpush2.bf16.msra.mxu0 0
    %460 = vmatprep.subr.bf16.mxu0 0
    %461 = vmatpush2.bf16.msra.mxu0 0
    %462 = vmatprep.subr.bf16.mxu0 0
    %463 = vmatpush2.bf16.msra.mxu0 0
    %464 = vmatprep.subr.bf16.mxu0 0
    %465 = vmatpush2.bf16.msra.mxu0 0
    %466 = vmatprep.subr.bf16.mxu0 0
    %467 = vmatpush2.bf16.msra.mxu0 0
    %468 = vmatprep.subr.bf16.mxu0 0
    %469 = vmatpush2.bf16.msra.mxu0 0
    %470 = vmatprep.mubr.bf16.mxu0 0
    %471 = vmatmul.mubr.bf16.gmra.mxu0 %v181
    %v472 = vpop.f32.mrf.mxu0
    %v473 = vadd.f32 %v177, %v472
    %v474 = vpop.f32.mrf.mxu0
    %v475 = vadd.f32 %v177, %v474
    %v476 = vpop.f32.mrf.mxu0
    %v477 = vpop.f32.mrf.mxu0
    %478 = vdwg.mxu0
    %479 = vmatprep.subr.bf16.mxu0 0
    %480 = vmatpush1.bf16.msra.mxu0 0
    %481 = vmatprep.subr.bf16.mxu0 0
    %482 = vmatpush1.bf16.msra.mxu0 0
    %483 = vmatprep.subr.bf16.mxu0 0
    %484 = vmatpush1.bf16.msra.mxu0 0
    %485 = vmatprep.subr.bf16.mxu0 0
    %486 = vmatpush1.bf16.msra.mxu0 0
    %487 = vmatprep.subr.bf16.mxu0 0
    %488 = vmatpush1.bf16.msra.mxu0 0
    %489 = vmatprep.subr.bf16.mxu0 0
    %490 = vmatpush1.bf16.msra.mxu0 %v436
    %491 = vmatprep.subr.bf16.mxu0 0
    %492 = vmatpush1.bf16.msra.mxu0 %v427
    %493 = vmatprep.subr.bf16.mxu0 0
    %494 = vmatpush1.bf16.msra.mxu0 %v403
    %495 = vmatprep.subr.bf16.mxu0 0
    %496 = vmatpush2.bf16.msra.mxu0 0
    %497 = vmatprep.subr.bf16.mxu0 0
    %498 = vmatpush2.bf16.msra.mxu0 0
    %499 = vmatprep.subr.bf16.mxu0 0
    %500 = vmatpush2.bf16.msra.mxu0 0
    %501 = vmatprep.subr.bf16.mxu0 0
    %502 = vmatpush2.bf16.msra.mxu0 0
    %503 = vmatprep.subr.bf16.mxu0 0
    %504 = vmatpush2.bf16.msra.mxu0 0
    %505 = vmatprep.subr.bf16.mxu0 0
    %506 = vmatpush2.bf16.msra.mxu0 0
    %507 = vmatprep.subr.bf16.mxu0 0
    %508 = vmatpush2.bf16.msra.mxu0 0
    %509 = vmatprep.subr.bf16.mxu0 0
    %510 = vmatpush2.bf16.msra.mxu0 0
    %511 = vmatprep.mubr.bf16.mxu0 0
    %512 = vmatmul.mubr.bf16.gmra.mxu0 %v181
    %v513 = vpop.f32.mrf.mxu0
    %v514 = vadd.f32 %v177, %v513
    %v515 = vpop.f32.mrf.mxu0
    %v516 = vpop.f32.mrf.mxu0
    %v517 = vpop.f32.mrf.mxu0
    %518 = vdwg.mxu0
    %s519 = scalar_lea.vmem %s3, 8
    %v520 = vld [vmem:[%s519] sm:$0xff]
    %522 = vset.pattern.permute.xlu0 0
    %523 = vperm.xlu0 %522, %v520
    %v524 = vpop.permute.xlu0 %523
    %v526 = vmul.f32 %v473, %v524
    %v527 = vmul.f32 %v475, %v524
    %v528 = vmul.f32 %v514, %v524
    %s529 = scalar_lea.vmem [#allocation2], 24
    %530 = vst [vmem:[%s529] sm:$0xff] %v526
    %531 = vst [vmem:[%s529 + $0x8] sm:$0xff] %v527
    %532 = vst.msk [vmem:[%s529 + $0x10] sm:$0xff] %vm284, %v528
    // Predicated region
    $region18: #{tpu_custom_call.1} parent=1 // pred_check
      _
    $region19: #{tpu_custom_call.1} parent=1 // pred_check_branch
      %534 = sbr.rel (0) target = $region21
    $region20: #{tpu_custom_call.1} parent=1 // pred_region
      %s536 = ssub.s32 768, 768
      %537 = vsyncadd [#allocation3], %s536
      %s538 = sshll.u32 [#allocation2], 4
      %s539 = int_to_ptr.vmem [resolvable:$true] %s538
      %544 = dma.vmem_to_hbm [thread:$0]  %s539, 768, %s4, [#allocation3], 384, 384, 24
    $region21: #{tpu_custom_call.1} parent=1 // pred_fallthru
      _
    // Predicated region
    $region22: #{tpu_custom_call.1} parent=1 // pred_check
      _
    $region23: #{tpu_custom_call.1} parent=1 // pred_check_branch
      %546 = sbr.rel (0) target = $region25
    $region24: #{tpu_custom_call.1} parent=1 // pred_region
      %547 = dma.done [#allocation3], 768
    $region25: #{tpu_custom_call.1} parent=1 // pred_fallthru
      _
    %548 = vsyncpa [#allocation3], 1

</llo_original>
